<compile_context>
chip_gen: v7x
topology: tpu7x:2x2x1
jax: 0.10.0
libtpu: 0.0.40
codegen_flags: <defaults>
</compile_context>

<pallas_src>
import jax
import jax.numpy as jnp
from jax.experimental import pallas as pl
from jax.experimental.pallas import tpu as pltpu


# ---------------------------------------------------------------------------
# Kernels
# ---------------------------------------------------------------------------

def highway_resident_kernel(x_ref, w_ref, b_ref, o_ref):
    """Whole highway stack on one row tile; weights/biases resident in VMEM.

    x_ref: [TB, S] f32   w_ref: [L, S, 2S] bf16   b_ref: [L, 1, 2S] f32
    o_ref: [TB, S] f32
    """
    S = x_ref.shape[1]
    L = w_ref.shape[0]
    x = x_ref[...].astype(jnp.float32)
    # L is a compile-time constant -> fully unrolled straight-line code with
    # static (zero-cost) slices into the resident weight/bias blocks.
    for l in range(L):
        y = jnp.dot(
            x.astype(jnp.bfloat16), w_ref[l], preferred_element_type=jnp.float32
        ) + b_ref[l]
        g = jnp.maximum(y[:, :S], 0.0)                 # relu(affine)
        t = 0.5 * (jnp.tanh(0.5 * y[:, S:]) + 1.0)     # sigmoid via one tanh EUP push
        x = x + t * (g - x)                            # t*g + (1-t)*x
    o_ref[...] = x.astype(o_ref.dtype)


def highway_layered_kernel(x_ref, w_ref, b_ref, o_ref):
    """One layer per grid step; o_ref (constant block index over the layer
    axis) is the VMEM-resident carried highway state.

    x_ref: [TB, S] f32   w_ref: [S, 2S] bf16 (layer dim squeezed)
    b_ref: [L, 1, 2S] f32 (resident)   o_ref: [TB, S] f32
    """
    l = pl.program_id(1)

    @pl.when(l == 0)
    def _():
        o_ref[...] = x_ref[...]

    S = o_ref.shape[1]
    x = o_ref[...].astype(jnp.float32)
    y = jnp.dot(
        x.astype(jnp.bfloat16), w_ref[...], preferred_element_type=jnp.float32
    ) + b_ref[l]
    g = jnp.maximum(y[:, :S], 0.0)
    t = 0.5 * (jnp.tanh(0.5 * y[:, S:]) + 1.0)
    o_ref[...] = (x + t * (g - x)).astype(o_ref.dtype)


# ---------------------------------------------------------------------------
# Wrapper
# ---------------------------------------------------------------------------

_VMEM_CAP = 48 * 1024 * 1024       # never request the full 64 MiB of a v7x TC
_VMEM_FLOOR = 16 * 1024 * 1024
_RESIDENT_WEIGHT_LIMIT = 12 * 1024 * 1024   # use resident path below this


def _vmem_limit(est_bytes):
    return int(min(_VMEM_CAP, max(_VMEM_FLOOR, est_bytes + (4 << 20))))


def highway_forward(x, w_fused, b_fused, *, block_m=None, force_layered=False):
    """x: [B, S] f32; w_fused: [L, S, 2S] bf16 (Wa|Wg); b_fused: [L, 1, 2S] f32."""
    B, S = x.shape
    L = w_fused.shape[0]
    assert w_fused.shape == (L, S, 2 * S)
    assert b_fused.shape == (L, 1, 2 * S)

    # Row-tile size: fill the MXU rows (256 on v6e/v7x) when we have the rows,
    # otherwise take all rows padded to a sublane multiple of 8.
    if block_m is None:
        block_m = 256 if B >= 256 else max(8, ((B + 7) // 8) * 8)
    padded_b = ((B + block_m - 1) // block_m) * block_m
    x_in = x if padded_b == B else jnp.zeros((padded_b, S), x.dtype).at[:B].set(x)
    grid_m = padded_b // block_m

    weight_bytes = int(w_fused.size) * w_fused.dtype.itemsize
    bias_bytes = int(b_fused.size) * b_fused.dtype.itemsize
    act_bytes = 2 * 2 * block_m * S * 4            # x + out tiles, double-buffered
    tmp_bytes = 4 * block_m * 2 * S * 4            # y/g/t/x temporaries (generous)

    use_resident = (weight_bytes <= _RESIDENT_WEIGHT_LIMIT) and not force_layered

    if use_resident:
        est = 2 * (weight_bytes + bias_bytes) + act_bytes + tmp_bytes
        out = pl.pallas_call(
            highway_resident_kernel,
            out_shape=jax.ShapeDtypeStruct((padded_b, S), x.dtype),
            grid_spec=pltpu.PrefetchScalarGridSpec(
                num_scalar_prefetch=0,
                grid=(grid_m,),
                in_specs=[
                    pl.BlockSpec((block_m, S), lambda m: (m, 0)),
                    # Full fused weights / biases, VMEM resident (constant block).
                    pl.BlockSpec((L, S, 2 * S), lambda m: (0, 0, 0)),
                    pl.BlockSpec((L, 1, 2 * S), lambda m: (0, 0, 0)),
                ],
                out_specs=pl.BlockSpec((block_m, S), lambda m: (m, 0)),
            ),
            compiler_params=pltpu.CompilerParams(
                dimension_semantics=("parallel",),       # row tiles -> both TCs (v7x)
                vmem_limit_bytes=_vmem_limit(est),
            ),
        )(x_in, w_fused, b_fused)
    else:
        # Layered fallback for large fused weights: one layer per grid step,
        # output block is the resident carry, biases stay fully resident.
        # TODO(synk): add output-feature (N) tiling of the weights for S>=~2048 on v7x.
        per_layer_weight = 2 * S * 2 * S * w_fused.dtype.itemsize
        est = 2 * per_layer_weight + 2 * bias_bytes + act_bytes + tmp_bytes
        out = pl.pallas_call(
            highway_layered_kernel,
            out_shape=jax.ShapeDtypeStruct((padded_b, S), x.dtype),
            grid_spec=pltpu.PrefetchScalarGridSpec(
                num_scalar_prefetch=0,
                grid=(grid_m, L),
                in_specs=[
                    pl.BlockSpec((block_m, S), lambda m, l: (m, 0)),
                    pl.BlockSpec((pl.Squeezed(), S, 2 * S), lambda m, l: (l, 0, 0)),
                    pl.BlockSpec((L, 1, 2 * S), lambda m, l: (0, 0, 0)),   # resident
                ],
                out_specs=pl.BlockSpec((block_m, S), lambda m, l: (m, 0)),
            ),
            compiler_params=pltpu.CompilerParams(
                dimension_semantics=("parallel", "arbitrary"),
                vmem_limit_bytes=_vmem_limit(est),
            ),
        )(x_in, w_fused, b_fused)

    return out[:B] if padded_b != B else out


# ---------------------------------------------------------------------------
# Params / reference
# ---------------------------------------------------------------------------

def init_highway_params(key, size, num_layers, gate_bias=-2.0):
    """nn.Linear-style uniform(+/- 1/sqrt(size)) init; gate bias = gate_bias.
    Returns fused params:
      w_fused: [L, S, 2S] bfloat16  (cols 0:S = affine W^T, S:2S = gate W^T)
      b_fused: [L, 1, 2S] float32   (affine bias | gate bias)
    """
    bound = 1.0 / jnp.sqrt(jnp.asarray(size, jnp.float32))
    k_wa, k_ba, k_wg = jax.random.split(key, 3)
    wa = jax.random.uniform(k_wa, (num_layers, size, size), jnp.float32, -bound, bound)
    wg = jax.random.uniform(k_wg, (num_layers, size, size), jnp.float32, -bound, bound)
    ba = jax.random.uniform(k_ba, (num_layers, 1, size), jnp.float32, -bound, bound)
    bg = jnp.full((num_layers, 1, size), gate_bias, jnp.float32)
    w_fused = jnp.concatenate([wa, wg], axis=-1).astype(jnp.bfloat16)
    b_fused = jnp.concatenate([ba, bg], axis=-1)
    return w_fused, b_fused


def highway_reference(x, w_fused, b_fused):
    """Pure-JAX reference of the PyTorch forward (same bf16-weight numerics)."""
    S = x.shape[1]
    x = x.astype(jnp.float32)
    for l in range(w_fused.shape[0]):
        y = jnp.dot(
            x.astype(jnp.bfloat16), w_fused[l], preferred_element_type=jnp.float32
        ) + b_fused[l]
        g = jax.nn.relu(y[:, :S])
        t = jax.nn.sigmoid(y[:, S:])
        x = t * g + (1.0 - t) * x
    return x


# ---------------------------------------------------------------------------
# Test
# ---------------------------------------------------------------------------

if __name__ == "__main__":
    batch, size, num_layers = 8, 128, 3  # small but lane-dense (S % 128 == 0)

    key = jax.random.PRNGKey(0)
    k_x, k_p = jax.random.split(key)
    x = jax.random.normal(k_x, (batch, size), jnp.float32)
    w_fused, b_fused = init_highway_params(k_p, size, num_layers)
    ref = highway_reference(x, w_fused, b_fused)

    # Path 1: resident-weights kernel (default at this size).
    out = jax.block_until_ready(highway_forward(x, w_fused, b_fused))
    assert out.shape == (batch, size)
    assert jnp.allclose(out, ref, atol=2e-4, rtol=2e-4), "resident path mismatch"

    # Path 2: layered fallback kernel (forced), same numerics expected.
    out_l = jax.block_until_ready(
        highway_forward(x, w_fused, b_fused, force_layered=True)
    )
    assert jnp.allclose(out_l, ref, atol=2e-4, rtol=2e-4), "layered path mismatch"

    # Path 3: row-tiled / padded batch (exercises the parallel M grid axis).
    xb = jax.random.normal(jax.random.PRNGKey(1), (300, size), jnp.float32)
    refb = highway_reference(xb, w_fused, b_fused)
    outb = jax.block_until_ready(highway_forward(xb, w_fused, b_fused))
    assert outb.shape == xb.shape
    assert jnp.allclose(outb, refb, atol=2e-4, rtol=2e-4), "tiled path mismatch"

    print("KERNEL_OK")
</pallas_src>

<mosaic_0001>
module attributes {stable_mosaic.version = 11 : i64} {
  func.func @highway_resident_kernel(%arg0: i32, %arg1: memref<8x128xf32, #tpu.memory_space<vmem>>, %arg2: memref<3x128x256xbf16, #tpu.memory_space<vmem>>, %arg3: memref<3x1x256xf32, #tpu.memory_space<vmem>>, %arg4: memref<8x128xf32, #tpu.memory_space<vmem>>) attributes {dimension_semantics = [#tpu.dimension_semantics<parallel>], iteration_bounds = array<i64: 1>, scalar_prefetch = 0 : i64, scratch_operands = 0 : i64, tpu.core_type = #tpu.core_type<tc>, window_params = [{transform_indices = @transform_0, window_bounds = array<i64: 8, 128>}, {pipeline_mode = #tpu.pipeline_mode<synchronous>, transform_indices = @transform_1, window_bounds = array<i64: 3, 128, 256>}, {pipeline_mode = #tpu.pipeline_mode<synchronous>, transform_indices = @transform_2, window_bounds = array<i64: 3, 1, 256>}, {transform_indices = @transform_3, window_bounds = array<i64: 8, 128>}]} {
    %c0 = arith.constant 0 : index
    %c0_0 = arith.constant 0 : index
    %0 = vector.load %arg1[%c0, %c0_0] : memref<8x128xf32, #tpu.memory_space<vmem>>, vector<8x128xf32>
    %1 = arith.truncf %0 : vector<8x128xf32> to vector<8x128xbf16>
    %c0_1 = arith.constant 0 : index
    %c0_2 = arith.constant 0 : index
    %c0_3 = arith.constant 0 : index
    %2 = vector.load %arg2[%c0_1, %c0_2, %c0_3] : memref<3x128x256xbf16, #tpu.memory_space<vmem>>, vector<1x128x256xbf16>
    %3 = vector.shape_cast %2 : vector<1x128x256xbf16> to vector<128x256xbf16>
    %cst = arith.constant dense<0.000000e+00> : vector<8x256xf32>
    %4 = tpu.matmul %1, %3, %cst {dimension_numbers = #tpu.dot_dimension_numbers<[1], [0], [0], [1], [0, 0, 1, 1], [], []>} : vector<8x128xbf16>, vector<128x256xbf16>, vector<8x256xf32> -> vector<8x256xf32>
    %c0_4 = arith.constant 0 : index
    %c0_5 = arith.constant 0 : index
    %c0_6 = arith.constant 0 : index
    %5 = vector.load %arg3[%c0_4, %c0_5, %c0_6] : memref<3x1x256xf32, #tpu.memory_space<vmem>>, vector<1x1x256xf32>
    %6 = vector.shape_cast %5 : vector<1x1x256xf32> to vector<1x256xf32>
    %7 = vector.broadcast %6 : vector<1x256xf32> to vector<8x256xf32>
    %8 = arith.addf %4, %7 : vector<8x256xf32>
    %9 = vector.extract_strided_slice %8 {offsets = [0, 0], sizes = [8, 128], strides = [1, 1]} : vector<8x256xf32> to vector<8x128xf32>
    %cst_7 = arith.constant 0.000000e+00 : f32
    %10 = vector.broadcast %cst_7 : f32 to vector<8x128xf32>
    %11 = arith.maximumf %9, %10 : vector<8x128xf32>
    %12 = vector.extract_strided_slice %8 {offsets = [0, 128], sizes = [8, 128], strides = [1, 1]} : vector<8x256xf32> to vector<8x128xf32>
    %cst_8 = arith.constant 5.000000e-01 : f32
    %13 = vector.broadcast %cst_8 : f32 to vector<8x128xf32>
    %14 = arith.mulf %13, %12 : vector<8x128xf32>
    %15 = math.tanh %14 : vector<8x128xf32>
    %cst_9 = arith.constant 1.000000e+00 : f32
    %16 = vector.broadcast %cst_9 : f32 to vector<8x128xf32>
    %17 = arith.addf %15, %16 : vector<8x128xf32>
    %cst_10 = arith.constant 5.000000e-01 : f32
    %18 = vector.broadcast %cst_10 : f32 to vector<8x128xf32>
    %19 = arith.mulf %18, %17 : vector<8x128xf32>
    %20 = arith.subf %11, %0 : vector<8x128xf32>
    %21 = arith.mulf %19, %20 : vector<8x128xf32>
    %22 = arith.addf %0, %21 : vector<8x128xf32>
    %23 = arith.truncf %22 : vector<8x128xf32> to vector<8x128xbf16>
    %c1 = arith.constant 1 : index
    %c0_11 = arith.constant 0 : index
    %c0_12 = arith.constant 0 : index
    %24 = vector.load %arg2[%c1, %c0_11, %c0_12] : memref<3x128x256xbf16, #tpu.memory_space<vmem>>, vector<1x128x256xbf16>
    %25 = vector.shape_cast %24 : vector<1x128x256xbf16> to vector<128x256xbf16>
    %cst_13 = arith.constant dense<0.000000e+00> : vector<8x256xf32>
    %26 = tpu.matmul %23, %25, %cst_13 {dimension_numbers = #tpu.dot_dimension_numbers<[1], [0], [0], [1], [0, 0, 1, 1], [], []>} : vector<8x128xbf16>, vector<128x256xbf16>, vector<8x256xf32> -> vector<8x256xf32>
    %c1_14 = arith.constant 1 : index
    %c0_15 = arith.constant 0 : index
    %c0_16 = arith.constant 0 : index
    %27 = vector.load %arg3[%c1_14, %c0_15, %c0_16] : memref<3x1x256xf32, #tpu.memory_space<vmem>>, vector<1x1x256xf32>
    %28 = vector.shape_cast %27 : vector<1x1x256xf32> to vector<1x256xf32>
    %29 = vector.broadcast %28 : vector<1x256xf32> to vector<8x256xf32>
    %30 = arith.addf %26, %29 : vector<8x256xf32>
    %31 = vector.extract_strided_slice %30 {offsets = [0, 0], sizes = [8, 128], strides = [1, 1]} : vector<8x256xf32> to vector<8x128xf32>
    %cst_17 = arith.constant 0.000000e+00 : f32
    %32 = vector.broadcast %cst_17 : f32 to vector<8x128xf32>
    %33 = arith.maximumf %31, %32 : vector<8x128xf32>
    %34 = vector.extract_strided_slice %30 {offsets = [0, 128], sizes = [8, 128], strides = [1, 1]} : vector<8x256xf32> to vector<8x128xf32>
    %cst_18 = arith.constant 5.000000e-01 : f32
    %35 = vector.broadcast %cst_18 : f32 to vector<8x128xf32>
    %36 = arith.mulf %35, %34 : vector<8x128xf32>
    %37 = math.tanh %36 : vector<8x128xf32>
    %cst_19 = arith.constant 1.000000e+00 : f32
    %38 = vector.broadcast %cst_19 : f32 to vector<8x128xf32>
    %39 = arith.addf %37, %38 : vector<8x128xf32>
    %cst_20 = arith.constant 5.000000e-01 : f32
    %40 = vector.broadcast %cst_20 : f32 to vector<8x128xf32>
    %41 = arith.mulf %40, %39 : vector<8x128xf32>
    %42 = arith.subf %33, %22 : vector<8x128xf32>
    %43 = arith.mulf %41, %42 : vector<8x128xf32>
    %44 = arith.addf %22, %43 : vector<8x128xf32>
    %45 = arith.truncf %44 : vector<8x128xf32> to vector<8x128xbf16>
    %c2 = arith.constant 2 : index
    %c0_21 = arith.constant 0 : index
    %c0_22 = arith.constant 0 : index
    %46 = vector.load %arg2[%c2, %c0_21, %c0_22] : memref<3x128x256xbf16, #tpu.memory_space<vmem>>, vector<1x128x256xbf16>
    %47 = vector.shape_cast %46 : vector<1x128x256xbf16> to vector<128x256xbf16>
    %cst_23 = arith.constant dense<0.000000e+00> : vector<8x256xf32>
    %48 = tpu.matmul %45, %47, %cst_23 {dimension_numbers = #tpu.dot_dimension_numbers<[1], [0], [0], [1], [0, 0, 1, 1], [], []>} : vector<8x128xbf16>, vector<128x256xbf16>, vector<8x256xf32> -> vector<8x256xf32>
    %c2_24 = arith.constant 2 : index
    %c0_25 = arith.constant 0 : index
    %c0_26 = arith.constant 0 : index
    %49 = vector.load %arg3[%c2_24, %c0_25, %c0_26] : memref<3x1x256xf32, #tpu.memory_space<vmem>>, vector<1x1x256xf32>
    %50 = vector.shape_cast %49 : vector<1x1x256xf32> to vector<1x256xf32>
    %51 = vector.broadcast %50 : vector<1x256xf32> to vector<8x256xf32>
    %52 = arith.addf %48, %51 : vector<8x256xf32>
    %53 = vector.extract_strided_slice %52 {offsets = [0, 0], sizes = [8, 128], strides = [1, 1]} : vector<8x256xf32> to vector<8x128xf32>
    %cst_27 = arith.constant 0.000000e+00 : f32
    %54 = vector.broadcast %cst_27 : f32 to vector<8x128xf32>
    %55 = arith.maximumf %53, %54 : vector<8x128xf32>
    %56 = vector.extract_strided_slice %52 {offsets = [0, 128], sizes = [8, 128], strides = [1, 1]} : vector<8x256xf32> to vector<8x128xf32>
    %cst_28 = arith.constant 5.000000e-01 : f32
    %57 = vector.broadcast %cst_28 : f32 to vector<8x128xf32>
    %58 = arith.mulf %57, %56 : vector<8x128xf32>
    %59 = math.tanh %58 : vector<8x128xf32>
    %cst_29 = arith.constant 1.000000e+00 : f32
    %60 = vector.broadcast %cst_29 : f32 to vector<8x128xf32>
    %61 = arith.addf %59, %60 : vector<8x128xf32>
    %cst_30 = arith.constant 5.000000e-01 : f32
    %62 = vector.broadcast %cst_30 : f32 to vector<8x128xf32>
    %63 = arith.mulf %62, %61 : vector<8x128xf32>
    %64 = arith.subf %55, %44 : vector<8x128xf32>
    %65 = arith.mulf %63, %64 : vector<8x128xf32>
    %66 = arith.addf %44, %65 : vector<8x128xf32>
    %c0_31 = arith.constant 0 : index
    %c0_32 = arith.constant 0 : index
    %67 = vector.load %arg4[%c0_31, %c0_32] : memref<8x128xf32, #tpu.memory_space<vmem>>, vector<8x128xf32>
    tpu.vector_store %arg4[%c0_31, %c0_32], %66 {strides = array<i32>} : memref<8x128xf32, #tpu.memory_space<vmem>>, vector<8x128xf32>,
    return
  }
  func.func @transform_0(%arg0: i32) -> (i32, i32) {
    %c0_i32 = arith.constant 0 : i32
    %c0_i32_0 = arith.constant 0 : i32
    return %arg0, %c0_i32 : i32, i32
  }
  func.func @transform_1(%arg0: i32) -> (i32, i32, i32) {
    %c0_i32 = arith.constant 0 : i32
    %c0_i32_0 = arith.constant 0 : i32
    %c0_i32_1 = arith.constant 0 : i32
    %c0_i32_2 = arith.constant 0 : i32
    return %c0_i32, %c0_i32_0, %c0_i32_1 : i32, i32, i32
  }
  func.func @transform_2(%arg0: i32) -> (i32, i32, i32) {
    %c0_i32 = arith.constant 0 : i32
    %c0_i32_0 = arith.constant 0 : i32
    %c0_i32_1 = arith.constant 0 : i32
    %c0_i32_2 = arith.constant 0 : i32
    return %c0_i32, %c0_i32_0, %c0_i32_1 : i32, i32, i32
  }
  func.func @transform_3(%arg0: i32) -> (i32, i32) {
    %c0_i32 = arith.constant 0 : i32
    %c0_i32_0 = arith.constant 0 : i32
    return %arg0, %c0_i32 : i32, i32
  }
}

</mosaic_0001>

<llo_original>
// kernel: tpu_custom_call.1
$region0: #{tpu_custom_call.1}
  #allocation0 [shape = 'u32[]', space=smem, size = 0x4, offset = 0x4, fixed_abs, tag = 'smem constant byte address 0x4 - core index']
  #allocation1 [shape = 'u32[144,128]{1,0:T(1,128)}', space=vmem, size = 0x12000, scoped, tag = 'internal scratch']
  %s0 = inlined_call_operand.hbm [shape: f32[8,128], index: 0, kind: input, shape index: {}]
  %s1 = inlined_call_operand.hbm [shape: bf16[3,128,256], index: 1, kind: input, shape index: {}]
  %s2 = inlined_call_operand.vmem [shape: f32[3,1,256], index: 2, kind: input, shape index: {}]
  %s3 = inlined_call_operand.hbm [shape: f32[8,128], index: 3, kind: output, shape index: {}]
  %s4 = sld [smem:[#allocation0]]
  $region30: #{tpu_custom_call.1} parent=0
    _
  %s6 = ssub.s32 1, %s4
  %s7 = scalar_select 0, %s6, %s4
  $region1: #{tpu_custom_call.1} parent=0
    #allocation2 [shape = 'u8[4096]{0}', space=vmem, size = 0x1000, scoped, tag = 'input window, operand 0, single buffered']
    #allocation3 [shape = 's32[1]{0}', space=sflag, size = 0x4, scoped, tag = 'scoped memory for tpu_custom_call.1']
    #allocation4 [shape = 's32[1]{0}', space=sflag, size = 0x4, scoped, tag = 'scoped memory for tpu_custom_call.1']
    #allocation5 [shape = 'u8[196608]{0}', space=vmem, size = 0x30000, scoped, tag = 'input window, operand 1, single buffered']
    #allocation6 [shape = 's32[1]{0}', space=sflag, size = 0x4, scoped, tag = 'scoped memory for tpu_custom_call.1']
    #allocation7 [shape = 'u8[4096]{0}', space=vmem, size = 0x1000, scoped, tag = 'output window, operand 0, single buffered']
    %8 = vsyncpa [#allocation3], 0
    %9 = vsyncpa [#allocation6], 0
    %10 = vsyncpa [#allocation4], 0
    // Predicated region
    $region2: #{tpu_custom_call.1} parent=1 // pred_check
      _
    $region3: #{tpu_custom_call.1} parent=1 // pred_check_branch
      %12 = sbr.rel (0) target = $region5
    $region4: #{tpu_custom_call.1} parent=1 // pred_region
      %s14 = ssub.s32 128, 128
      %15 = vsyncadd [#allocation3], %s14
      %s17 = sshll.u32 [#allocation2], 4
      %s18 = int_to_ptr.vmem [resolvable:$true] %s17
      %20 = dma.hbm_to_vmem [thread:$0]  %s0, 128, %s18, [#allocation3]
    $region5: #{tpu_custom_call.1} parent=1 // pred_fallthru
      _
    // Predicated region
    $region6: #{tpu_custom_call.1} parent=1 // pred_check
      _
    $region7: #{tpu_custom_call.1} parent=1 // pred_check_branch
      %22 = sbr.rel (0) target = $region9
    $region8: #{tpu_custom_call.1} parent=1 // pred_region
      %s24 = ssub.s32 6144, 6144
      %25 = vsyncadd [#allocation6], %s24
      %s26 = sshll.u32 [#allocation5], 4
      %s27 = int_to_ptr.vmem [resolvable:$true] %s26
      %32 = dma.hbm_to_vmem [thread:$0]  %s1, 6144, %s27, [#allocation6], 128, 128, 8
    $region9: #{tpu_custom_call.1} parent=1 // pred_fallthru
      _
    // Predicated region
    $region10: #{tpu_custom_call.1} parent=1 // pred_check
      _
    $region11: #{tpu_custom_call.1} parent=1 // pred_check_branch
      %34 = sbr.rel (0) target = $region13
    $region12: #{tpu_custom_call.1} parent=1 // pred_region
      _
    $region13: #{tpu_custom_call.1} parent=1 // pred_fallthru
      _
    // Predicated region
    $region14: #{tpu_custom_call.1} parent=1 // pred_check
      _
    $region15: #{tpu_custom_call.1} parent=1 // pred_check_branch
      %36 = sbr.rel (0) target = $region17
    $region16: #{tpu_custom_call.1} parent=1 // pred_region
      %37 = dma.done [#allocation3], 128
    $region17: #{tpu_custom_call.1} parent=1 // pred_fallthru
      _
    // Predicated region
    $region18: #{tpu_custom_call.1} parent=1 // pred_check
      _
    $region19: #{tpu_custom_call.1} parent=1 // pred_check_branch
      %39 = sbr.rel (0) target = $region21
    $region20: #{tpu_custom_call.1} parent=1 // pred_region
      %40 = dma.done [#allocation6], 6144
    $region21: #{tpu_custom_call.1} parent=1 // pred_fallthru
      _
    %v42 = vld [vmem:[#allocation2] sm:$0xff]
    %v43 = vpack.c.bf16 %v42, %v42
    %v44 = vld [vmem:[#allocation5] sm:$0xff]
    %v45 = vld [vmem:[#allocation5 + $0x8] sm:$0xff]
    %v46 = vld [vmem:[#allocation5 + $0x10] sm:$0xff]
    %v47 = vld [vmem:[#allocation5 + $0x18] sm:$0xff]
    %v48 = vld [vmem:[#allocation5 + $0x20] sm:$0xff]
    %v49 = vld [vmem:[#allocation5 + $0x28] sm:$0xff]
    %v50 = vld [vmem:[#allocation5 + $0x30] sm:$0xff]
    %v51 = vld [vmem:[#allocation5 + $0x38] sm:$0xff]
    %v52 = vld [vmem:[#allocation5 + $0x40] sm:$0xff]
    %v53 = vld [vmem:[#allocation5 + $0x48] sm:$0xff]
    %v54 = vld [vmem:[#allocation5 + $0x50] sm:$0xff]
    %v55 = vld [vmem:[#allocation5 + $0x58] sm:$0xff]
    %v56 = vld [vmem:[#allocation5 + $0x60] sm:$0xff]
    %v57 = vld [vmem:[#allocation5 + $0x68] sm:$0xff]
    %v58 = vld [vmem:[#allocation5 + $0x70] sm:$0xff]
    %v59 = vld [vmem:[#allocation5 + $0x78] sm:$0xff]
    %v60 = vld [vmem:[%s2] sm:$0x3]
    %v62 = vlaneseq
    %v63 = vshrl.u32 %v62, 7
    %v64 = vsub.s32 0, %v63
    %v65 = vrot.slane %v60, %v64
    %v66 = vlaneseq
    %v67 = vshrl.u32 %v66, 7
    %v68 = vsub.s32 1, %v67
    %v69 = vrot.slane %v60, %v68
    %v88 = vunpack.c.l.b16 %v44
    %v89 = vunpack.c.h.b16 %v44
    %v90 = vunpack.c.l.b16 %v45
    %v91 = vunpack.c.h.b16 %v45
    %v92 = vunpack.c.l.b16 %v46
    %v93 = vunpack.c.h.b16 %v46
    %v94 = vunpack.c.l.b16 %v47
    %v95 = vunpack.c.h.b16 %v47
    %v96 = vunpack.c.l.b16 %v48
    %v97 = vunpack.c.h.b16 %v48
    %v98 = vunpack.c.l.b16 %v49
    %v99 = vunpack.c.h.b16 %v49
    %v100 = vunpack.c.l.b16 %v50
    %v101 = vunpack.c.h.b16 %v50
    %v102 = vunpack.c.l.b16 %v51
    %v103 = vunpack.c.h.b16 %v51
    %v104 = vunpack.c.l.b16 %v52
    %v105 = vunpack.c.h.b16 %v52
    %v106 = vunpack.c.l.b16 %v53
    %v107 = vunpack.c.h.b16 %v53
    %v108 = vunpack.c.l.b16 %v54
    %v109 = vunpack.c.h.b16 %v54
    %v110 = vunpack.c.l.b16 %v55
    %v111 = vunpack.c.h.b16 %v55
    %v112 = vunpack.c.l.b16 %v56
    %v113 = vunpack.c.h.b16 %v56
    %v114 = vunpack.c.l.b16 %v57
    %v115 = vunpack.c.h.b16 %v57
    %v116 = vunpack.c.l.b16 %v58
    %v117 = vunpack.c.h.b16 %v58
    %v118 = vunpack.c.l.b16 %v59
    %v119 = vunpack.c.h.b16 %v59
    %v120 = vpack.c.b16 %v90, %v88
    %v121 = vpack.c.b16 %v91, %v89
    %v122 = vpack.c.b16 %v94, %v92
    %v123 = vpack.c.b16 %v95, %v93
    %v124 = vpack.c.b16 %v98, %v96
    %v125 = vpack.c.b16 %v99, %v97
    %v126 = vpack.c.b16 %v102, %v100
    %v127 = vpack.c.b16 %v103, %v101
    %v128 = vpack.c.b16 %v106, %v104
    %v129 = vpack.c.b16 %v107, %v105
    %v130 = vpack.c.b16 %v110, %v108
    %v131 = vpack.c.b16 %v111, %v109
    %v132 = vpack.c.b16 %v114, %v112
    %v133 = vpack.c.b16 %v115, %v113
    %v134 = vpack.c.b16 %v118, %v116
    %v135 = vpack.c.b16 %v119, %v117
    %152 = vmatprep.subr.bf16.mxu0 %v121
    %153 = vmatpush1.bf16.msra.mxu0 %v120
    %154 = vmatprep.subr.bf16.mxu0 %v123
    %155 = vmatpush1.bf16.msra.mxu0 %v122
    %156 = vmatprep.subr.bf16.mxu0 %v125
    %157 = vmatpush1.bf16.msra.mxu0 %v124
    %158 = vmatprep.subr.bf16.mxu0 %v127
    %159 = vmatpush1.bf16.msra.mxu0 %v126
    %160 = vmatprep.subr.bf16.mxu0 %v129
    %161 = vmatpush1.bf16.msra.mxu0 %v128
    %162 = vmatprep.subr.bf16.mxu0 %v131
    %163 = vmatpush1.bf16.msra.mxu0 %v130
    %164 = vmatprep.subr.bf16.mxu0 %v133
    %165 = vmatpush1.bf16.msra.mxu0 %v132
    %166 = vmatprep.subr.bf16.mxu0 %v135
    %167 = vmatpush1.bf16.msra.mxu0 %v134
    %168 = vmatprep.subr.bf16.mxu0 0
    %169 = vmatpush1.bf16.msra.mxu0 0
    %170 = vmatprep.subr.bf16.mxu0 0
    %171 = vmatpush1.bf16.msra.mxu0 0
    %172 = vmatprep.subr.bf16.mxu0 0
    %173 = vmatpush1.bf16.msra.mxu0 0
    %174 = vmatprep.subr.bf16.mxu0 0
    %175 = vmatpush1.bf16.msra.mxu0 0
    %176 = vmatprep.subr.bf16.mxu0 0
    %177 = vmatpush1.bf16.msra.mxu0 0
    %178 = vmatprep.subr.bf16.mxu0 0
    %179 = vmatpush1.bf16.msra.mxu0 0
    %180 = vmatprep.subr.bf16.mxu0 0
    %181 = vmatpush1.bf16.msra.mxu0 0
    %182 = vmatprep.subr.bf16.mxu0 0
    %183 = vmatpush1.bf16.msra.mxu0 0
    %184 = vmatprep.mubr.bf16.mxu0 0
    %185 = vmatmul.mubr.bf16.gmra.mrb[0].mxu0 %v43
    %v186 = vpop.f32.mrb[0].mxu0
    %v187 = vadd.f32 %v65, %v186
    %v188 = vpop.f32.mrb[0].mxu0
    %v189 = vadd.f32 %v69, %v188
    %v190 = vpop.f32.mrb[0].mxu0
    %v191 = vpop.f32.mrb[0].mxu0
    %192 = vdwg.mxu0
    %v193 = vmax.f32 %v187, 0.0
    %v194 = vmul.f32 %v189, 0.5
    %v195 = vtanh.pop %v194
    %v196 = vadd.f32 %v195, 1.0
    %v197 = vmul.f32 %v196, 0.5
    %v198 = vsub.f32 %v193, %v42
    %v199 = vmul.f32 %v197, %v198
    %v200 = vadd.f32 %v42, %v199
    %v201 = vpack.c.bf16 %v200, %v200
    %s202 = scalar_lea.vmem [#allocation5], 128
    %v203 = vld [vmem:[%s202] sm:$0xff]
    %v204 = vld [vmem:[%s202 + $0x8] sm:$0xff]
    %v205 = vld [vmem:[%s202 + $0x10] sm:$0xff]
    %v206 = vld [vmem:[%s202 + $0x18] sm:$0xff]
    %v207 = vld [vmem:[%s202 + $0x20] sm:$0xff]
    %v208 = vld [vmem:[%s202 + $0x28] sm:$0xff]
    %v209 = vld [vmem:[%s202 + $0x30] sm:$0xff]
    %v210 = vld [vmem:[%s202 + $0x38] sm:$0xff]
    %v211 = vld [vmem:[%s202 + $0x40] sm:$0xff]
    %v212 = vld [vmem:[%s202 + $0x48] sm:$0xff]
    %v213 = vld [vmem:[%s202 + $0x50] sm:$0xff]
    %v214 = vld [vmem:[%s202 + $0x58] sm:$0xff]
    %v215 = vld [vmem:[%s202 + $0x60] sm:$0xff]
    %v216 = vld [vmem:[%s202 + $0x68] sm:$0xff]
    %v217 = vld [vmem:[%s202 + $0x70] sm:$0xff]
    %v218 = vld [vmem:[%s202 + $0x78] sm:$0xff]
    %s219 = scalar_lea.vmem %s2, 2
    %v220 = vld [vmem:[%s219] sm:$0x3]
    %v222 = vlaneseq
    %v223 = vshrl.u32 %v222, 7
    %v224 = vsub.s32 0, %v223
    %v225 = vrot.slane %v220, %v224
    %v226 = vlaneseq
    %v227 = vshrl.u32 %v226, 7
    %v228 = vsub.s32 1, %v227
    %v229 = vrot.slane %v220, %v228
    %v248 = vunpack.c.l.b16 %v203
    %v249 = vunpack.c.h.b16 %v203
    %v250 = vunpack.c.l.b16 %v204
    %v251 = vunpack.c.h.b16 %v204
    %v252 = vunpack.c.l.b16 %v205
    %v253 = vunpack.c.h.b16 %v205
    %v254 = vunpack.c.l.b16 %v206
    %v255 = vunpack.c.h.b16 %v206
    %v256 = vunpack.c.l.b16 %v207
    %v257 = vunpack.c.h.b16 %v207
    %v258 = vunpack.c.l.b16 %v208
    %v259 = vunpack.c.h.b16 %v208
    %v260 = vunpack.c.l.b16 %v209
    %v261 = vunpack.c.h.b16 %v209
    %v262 = vunpack.c.l.b16 %v210
    %v263 = vunpack.c.h.b16 %v210
    %v264 = vunpack.c.l.b16 %v211
    %v265 = vunpack.c.h.b16 %v211
    %v266 = vunpack.c.l.b16 %v212
    %v267 = vunpack.c.h.b16 %v212
    %v268 = vunpack.c.l.b16 %v213
    %v269 = vunpack.c.h.b16 %v213
    %v270 = vunpack.c.l.b16 %v214
    %v271 = vunpack.c.h.b16 %v214
    %v272 = vunpack.c.l.b16 %v215
    %v273 = vunpack.c.h.b16 %v215
    %v274 = vunpack.c.l.b16 %v216
    %v275 = vunpack.c.h.b16 %v216
    %v276 = vunpack.c.l.b16 %v217
    %v277 = vunpack.c.h.b16 %v217
    %v278 = vunpack.c.l.b16 %v218
    %v279 = vunpack.c.h.b16 %v218
    %v280 = vpack.c.b16 %v250, %v248
    %v281 = vpack.c.b16 %v251, %v249
    %v282 = vpack.c.b16 %v254, %v252
    %v283 = vpack.c.b16 %v255, %v253
    %v284 = vpack.c.b16 %v258, %v256
    %v285 = vpack.c.b16 %v259, %v257
    %v286 = vpack.c.b16 %v262, %v260
    %v287 = vpack.c.b16 %v263, %v261
    %v288 = vpack.c.b16 %v266, %v264
    %v289 = vpack.c.b16 %v267, %v265
    %v290 = vpack.c.b16 %v270, %v268
    %v291 = vpack.c.b16 %v271, %v269
    %v292 = vpack.c.b16 %v274, %v272
    %v293 = vpack.c.b16 %v275, %v273
    %v294 = vpack.c.b16 %v278, %v276
    %v295 = vpack.c.b16 %v279, %v277
    %312 = vmatprep.subr.bf16.mxu0 %v281
    %313 = vmatpush1.bf16.msra.mxu0 %v280
    %314 = vmatprep.subr.bf16.mxu0 %v283
    %315 = vmatpush1.bf16.msra.mxu0 %v282
    %316 = vmatprep.subr.bf16.mxu0 %v285
    %317 = vmatpush1.bf16.msra.mxu0 %v284
    %318 = vmatprep.subr.bf16.mxu0 %v287
    %319 = vmatpush1.bf16.msra.mxu0 %v286
    %320 = vmatprep.subr.bf16.mxu0 %v289
    %321 = vmatpush1.bf16.msra.mxu0 %v288
    %322 = vmatprep.subr.bf16.mxu0 %v291
    %323 = vmatpush1.bf16.msra.mxu0 %v290
    %324 = vmatprep.subr.bf16.mxu0 %v293
    %325 = vmatpush1.bf16.msra.mxu0 %v292
    %326 = vmatprep.subr.bf16.mxu0 %v295
    %327 = vmatpush1.bf16.msra.mxu0 %v294
    %328 = vmatprep.subr.bf16.mxu0 0
    %329 = vmatpush1.bf16.msra.mxu0 0
    %330 = vmatprep.subr.bf16.mxu0 0
    %331 = vmatpush1.bf16.msra.mxu0 0
    %332 = vmatprep.subr.bf16.mxu0 0
    %333 = vmatpush1.bf16.msra.mxu0 0
    %334 = vmatprep.subr.bf16.mxu0 0
    %335 = vmatpush1.bf16.msra.mxu0 0
    %336 = vmatprep.subr.bf16.mxu0 0
    %337 = vmatpush1.bf16.msra.mxu0 0
    %338 = vmatprep.subr.bf16.mxu0 0
    %339 = vmatpush1.bf16.msra.mxu0 0
    %340 = vmatprep.subr.bf16.mxu0 0
    %341 = vmatpush1.bf16.msra.mxu0 0
    %342 = vmatprep.subr.bf16.mxu0 0
    %343 = vmatpush1.bf16.msra.mxu0 0
    %344 = vmatprep.mubr.bf16.mxu0 0
    %345 = vmatmul.mubr.bf16.gmra.mrb[0].mxu0 %v201
    %v346 = vpop.f32.mrb[0].mxu0
    %v347 = vadd.f32 %v225, %v346
    %v348 = vpop.f32.mrb[0].mxu0
    %v349 = vadd.f32 %v229, %v348
    %v350 = vpop.f32.mrb[0].mxu0
    %v351 = vpop.f32.mrb[0].mxu0
    %352 = vdwg.mxu0
    %v353 = vmax.f32 %v347, 0.0
    %v354 = vmul.f32 %v349, 0.5
    %v355 = vtanh.pop %v354
    %v356 = vadd.f32 %v355, 1.0
    %v357 = vmul.f32 %v356, 0.5
    %v358 = vsub.f32 %v353, %v200
    %v359 = vmul.f32 %v357, %v358
    %v360 = vadd.f32 %v200, %v359
    %v361 = vpack.c.bf16 %v360, %v360
    %s362 = scalar_lea.vmem [#allocation5], 256
    %v363 = vld [vmem:[%s362] sm:$0xff]
    %v364 = vld [vmem:[%s362 + $0x8] sm:$0xff]
    %v365 = vld [vmem:[%s362 + $0x10] sm:$0xff]
    %v366 = vld [vmem:[%s362 + $0x18] sm:$0xff]
    %v367 = vld [vmem:[%s362 + $0x20] sm:$0xff]
    %v368 = vld [vmem:[%s362 + $0x28] sm:$0xff]
    %v369 = vld [vmem:[%s362 + $0x30] sm:$0xff]
    %v370 = vld [vmem:[%s362 + $0x38] sm:$0xff]
    %v371 = vld [vmem:[%s362 + $0x40] sm:$0xff]
    %v372 = vld [vmem:[%s362 + $0x48] sm:$0xff]
    %v373 = vld [vmem:[%s362 + $0x50] sm:$0xff]
    %v374 = vld [vmem:[%s362 + $0x58] sm:$0xff]
    %v375 = vld [vmem:[%s362 + $0x60] sm:$0xff]
    %v376 = vld [vmem:[%s362 + $0x68] sm:$0xff]
    %v377 = vld [vmem:[%s362 + $0x70] sm:$0xff]
    %v378 = vld [vmem:[%s362 + $0x78] sm:$0xff]
    %s379 = scalar_lea.vmem %s2, 4
    %v380 = vld [vmem:[%s379] sm:$0x3]
    %v382 = vlaneseq
    %v383 = vshrl.u32 %v382, 7
    %v384 = vsub.s32 0, %v383
    %v385 = vrot.slane %v380, %v384
    %v386 = vlaneseq
    %v387 = vshrl.u32 %v386, 7
    %v388 = vsub.s32 1, %v387
    %v389 = vrot.slane %v380, %v388
    %v408 = vunpack.c.l.b16 %v363
    %v409 = vunpack.c.h.b16 %v363
    %v410 = vunpack.c.l.b16 %v364
    %v411 = vunpack.c.h.b16 %v364
    %v412 = vunpack.c.l.b16 %v365
    %v413 = vunpack.c.h.b16 %v365
    %v414 = vunpack.c.l.b16 %v366
    %v415 = vunpack.c.h.b16 %v366
    %v416 = vunpack.c.l.b16 %v367
    %v417 = vunpack.c.h.b16 %v367
    %v418 = vunpack.c.l.b16 %v368
    %v419 = vunpack.c.h.b16 %v368
    %v420 = vunpack.c.l.b16 %v369
    %v421 = vunpack.c.h.b16 %v369
    %v422 = vunpack.c.l.b16 %v370
    %v423 = vunpack.c.h.b16 %v370
    %v424 = vunpack.c.l.b16 %v371
    %v425 = vunpack.c.h.b16 %v371
    %v426 = vunpack.c.l.b16 %v372
    %v427 = vunpack.c.h.b16 %v372
    %v428 = vunpack.c.l.b16 %v373
    %v429 = vunpack.c.h.b16 %v373
    %v430 = vunpack.c.l.b16 %v374
    %v431 = vunpack.c.h.b16 %v374
    %v432 = vunpack.c.l.b16 %v375
    %v433 = vunpack.c.h.b16 %v375
    %v434 = vunpack.c.l.b16 %v376
    %v435 = vunpack.c.h.b16 %v376
    %v436 = vunpack.c.l.b16 %v377
    %v437 = vunpack.c.h.b16 %v377
    %v438 = vunpack.c.l.b16 %v378
    %v439 = vunpack.c.h.b16 %v378
    %v440 = vpack.c.b16 %v410, %v408
    %v441 = vpack.c.b16 %v411, %v409
    %v442 = vpack.c.b16 %v414, %v412
    %v443 = vpack.c.b16 %v415, %v413
    %v444 = vpack.c.b16 %v418, %v416
    %v445 = vpack.c.b16 %v419, %v417
    %v446 = vpack.c.b16 %v422, %v420
    %v447 = vpack.c.b16 %v423, %v421
    %v448 = vpack.c.b16 %v426, %v424
    %v449 = vpack.c.b16 %v427, %v425
    %v450 = vpack.c.b16 %v430, %v428
    %v451 = vpack.c.b16 %v431, %v429
    %v452 = vpack.c.b16 %v434, %v432
    %v453 = vpack.c.b16 %v435, %v433
    %v454 = vpack.c.b16 %v438, %v436
    %v455 = vpack.c.b16 %v439, %v437
    %472 = vmatprep.subr.bf16.mxu0 %v441
    %473 = vmatpush1.bf16.msra.mxu0 %v440
    %474 = vmatprep.subr.bf16.mxu0 %v443
    %475 = vmatpush1.bf16.msra.mxu0 %v442
    %476 = vmatprep.subr.bf16.mxu0 %v445
    %477 = vmatpush1.bf16.msra.mxu0 %v444
    %478 = vmatprep.subr.bf16.mxu0 %v447
    %479 = vmatpush1.bf16.msra.mxu0 %v446
    %480 = vmatprep.subr.bf16.mxu0 %v449
    %481 = vmatpush1.bf16.msra.mxu0 %v448
    %482 = vmatprep.subr.bf16.mxu0 %v451
    %483 = vmatpush1.bf16.msra.mxu0 %v450
    %484 = vmatprep.subr.bf16.mxu0 %v453
    %485 = vmatpush1.bf16.msra.mxu0 %v452
    %486 = vmatprep.subr.bf16.mxu0 %v455
    %487 = vmatpush1.bf16.msra.mxu0 %v454
    %488 = vmatprep.subr.bf16.mxu0 0
    %489 = vmatpush1.bf16.msra.mxu0 0
    %490 = vmatprep.subr.bf16.mxu0 0
    %491 = vmatpush1.bf16.msra.mxu0 0
    %492 = vmatprep.subr.bf16.mxu0 0
    %493 = vmatpush1.bf16.msra.mxu0 0
    %494 = vmatprep.subr.bf16.mxu0 0
    %495 = vmatpush1.bf16.msra.mxu0 0
    %496 = vmatprep.subr.bf16.mxu0 0
    %497 = vmatpush1.bf16.msra.mxu0 0
    %498 = vmatprep.subr.bf16.mxu0 0
    %499 = vmatpush1.bf16.msra.mxu0 0
    %500 = vmatprep.subr.bf16.mxu0 0
    %501 = vmatpush1.bf16.msra.mxu0 0
    %502 = vmatprep.subr.bf16.mxu0 0
    %503 = vmatpush1.bf16.msra.mxu0 0
    %504 = vmatprep.mubr.bf16.mxu0 0
    %505 = vmatmul.mubr.bf16.gmra.mrb[0].mxu0 %v361
    %v506 = vpop.f32.mrb[0].mxu0
    %v507 = vadd.f32 %v385, %v506
    %v508 = vpop.f32.mrb[0].mxu0
    %v509 = vadd.f32 %v389, %v508
    %v510 = vpop.f32.mrb[0].mxu0
    %v511 = vpop.f32.mrb[0].mxu0
    %512 = vdwg.mxu0
    %v513 = vmax.f32 %v507, 0.0
    %v514 = vmul.f32 %v509, 0.5
    %v515 = vtanh.pop %v514
    %v516 = vadd.f32 %v515, 1.0
    %v517 = vmul.f32 %v516, 0.5
    %v518 = vsub.f32 %v513, %v360
    %v519 = vmul.f32 %v517, %v518
    %v520 = vadd.f32 %v360, %v519
    %521 = vst [vmem:[#allocation7] sm:$0xff] %v520
    // Predicated region
    $region22: #{tpu_custom_call.1} parent=1 // pred_check
      _
    $region23: #{tpu_custom_call.1} parent=1 // pred_check_branch
      %523 = sbr.rel (0) target = $region25
    $region24: #{tpu_custom_call.1} parent=1 // pred_region
      %s525 = ssub.s32 128, 128
      %526 = vsyncadd [#allocation4], %s525
      %s528 = sshll.u32 [#allocation7], 4
      %s529 = int_to_ptr.vmem [resolvable:$true] %s528
      %531 = dma.vmem_to_hbm [thread:$0]  %s529, 128, %s3, [#allocation4]
    $region25: #{tpu_custom_call.1} parent=1 // pred_fallthru
      _
    // Predicated region
    $region26: #{tpu_custom_call.1} parent=1 // pred_check
      _
    $region27: #{tpu_custom_call.1} parent=1 // pred_check_branch
      %533 = sbr.rel (0) target = $region29
    $region28: #{tpu_custom_call.1} parent=1 // pred_region
      %534 = dma.done [#allocation4], 128
    $region29: #{tpu_custom_call.1} parent=1 // pred_fallthru
      _
    %535 = vsyncpa [#allocation3], 1
    %536 = vsyncpa [#allocation6], 1
    %537 = vsyncpa [#allocation4], 1

</llo_original>
